<compile_context>
chip_gen: v7x
topology: tpu7x:2x2x1
jax: 0.10.0
libtpu: 0.0.40
codegen_flags: <defaults>
</compile_context>

<pallas_src>
import jax
import jax.numpy as jnp
from jax.experimental import pallas as pl
from jax.experimental.pallas import tpu as pltpu


def identity(x: jax.Array) -> jax.Array:
    """Identity.forward: pure pass-through. No kernel, no copy."""
    return x


_MIN_BYTES_TO_CHUNK = 8 * 1024 * 1024   # below this a single DMA is plenty
_MAX_DMAS_IN_FLIGHT = 4                  # 2-4 in-flight copies saturate HBM


def identity_copy(x: jax.Array) -> jax.Array:
    """Pallas TPU identity that materializes an independent copy of x.

    Direct HBM->HBM DMA (no VMEM staging): both refs use memory_space=pl.ANY
    and the kernel issues one DMA per leading-axis slab, starting all of them
    before waiting on any, so the copy runs at the HBM read+write roofline on
    v5e/v6e/v7x with no tiling or VMEM-budget tuning.
    """
    if x.ndim == 0 or x.size == 0:
        # Degenerate shapes: nothing worth launching a DMA kernel for.
        return x

    total_bytes = x.size * jnp.dtype(x.dtype).itemsize
    lead = x.shape[0]

    if total_bytes >= _MIN_BYTES_TO_CHUNK and lead >= 2:
        n_chunks = min(_MAX_DMAS_IN_FLIGHT, lead)
    else:
        n_chunks = 1

    # Static (start, size) slabs along the leading axis; handles any remainder
    # without masking because start/size are Python ints at trace time.
    base, rem = divmod(lead, n_chunks)
    bounds = []
    start = 0
    for i in range(n_chunks):
        size = base + (1 if i < rem else 0)
        bounds.append((start, size))
        start += size

    def _dma_copy_kernel(x_hbm, o_hbm, sems):
        # Start every slab's HBM->HBM DMA first (all in flight), then wait.
        for i, (s, n) in enumerate(bounds):
            pltpu.make_async_copy(
                x_hbm.at[pl.ds(s, n)], o_hbm.at[pl.ds(s, n)], sems.at[i]
            ).start()
        for i, (s, n) in enumerate(bounds):
            pltpu.make_async_copy(
                x_hbm.at[pl.ds(s, n)], o_hbm.at[pl.ds(s, n)], sems.at[i]
            ).wait()

    return pl.pallas_call(
        _dma_copy_kernel,
        out_shape=jax.ShapeDtypeStruct(x.shape, x.dtype),
        in_specs=[pl.BlockSpec(memory_space=pl.ANY)],
        out_specs=pl.BlockSpec(memory_space=pl.ANY),
        scratch_shapes=[pltpu.SemaphoreType.DMA((n_chunks,))],
    )(x)


if __name__ == "__main__":
    key = jax.random.PRNGKey(0)
    # NCHW input consistent with the image-classifier forward:
    # batch=2, channels=4, spatial=16x16.
    x = jax.random.normal(key, (2, 4, 16, 16), dtype=jnp.float32)

    # Preferred zero-cost identity path (exactly what Identity.forward does).
    y0 = identity(x)
    assert y0 is x

    # Pallas DMA-copy path (only for when a materialized kernel is mandated).
    y = identity_copy(x)
    jax.block_until_ready(y)
    assert y.shape == x.shape and y.dtype == x.dtype
    assert bool(jnp.all(y == x))

    # Awkward (non-128-divisible, sub-32-bit) shape: the DMA path needs no
    # lane/sublane special-casing or VMEM budgeting.
    x2 = jax.random.normal(jax.random.PRNGKey(1), (3, 5, 7), dtype=jnp.bfloat16)
    y2 = identity_copy(x2)
    jax.block_until_ready(y2)
    assert y2.shape == x2.shape and y2.dtype == x2.dtype
    assert bool(jnp.all(y2 == x2))

    print("KERNEL_OK")
</pallas_src>

<mosaic_0001>
module attributes {stable_mosaic.version = 11 : i64} {
  func.func @_dma_copy_kernel(%arg0: memref<2x4x16x16xf32, #tpu.memory_space<any>>, %arg1: memref<2x4x16x16xf32, #tpu.memory_space<any>>, %arg2: memref<1x!tpu.dma_semaphore, #tpu.memory_space<semaphore_mem>>) attributes {dimension_semantics = [], scalar_prefetch = 0 : i64, scratch_operands = 1 : i64, tpu.core_type = #tpu.core_type<tc>} {
    %c0_i32 = arith.constant 0 : i32
    %c0_i32_0 = arith.constant 0 : i32
    %c0_i32_1 = arith.constant 0 : i32
    %c0_i32_2 = arith.constant 0 : i32
    %c0_i32_3 = arith.constant 0 : i32
    %0 = tpu.memref_slice %arg0[%c0_i32_0, %c0_i32_1, %c0_i32_2, %c0_i32_3] : memref<2x4x16x16xf32, #tpu.memory_space<any>> -> memref<2x4x16x16xf32, #tpu.memory_space<any>>
    %c0_i32_4 = arith.constant 0 : i32
    %c0_i32_5 = arith.constant 0 : i32
    %c0_i32_6 = arith.constant 0 : i32
    %c0_i32_7 = arith.constant 0 : i32
    %1 = tpu.memref_slice %arg1[%c0_i32_4, %c0_i32_5, %c0_i32_6, %c0_i32_7] : memref<2x4x16x16xf32, #tpu.memory_space<any>> -> memref<2x4x16x16xf32, #tpu.memory_space<any>>
    %2 = tpu.memref_slice %arg2[%c0_i32] : memref<1x!tpu.dma_semaphore, #tpu.memory_space<semaphore_mem>> -> memref<1x!tpu.dma_semaphore, #tpu.memory_space<semaphore_mem>>
    %3 = tpu.memref_squeeze %2 : memref<1x!tpu.dma_semaphore, #tpu.memory_space<semaphore_mem>> -> memref<!tpu.dma_semaphore, #tpu.memory_space<semaphore_mem>>
    tpu.enqueue_dma source(%0 : memref<2x4x16x16xf32, #tpu.memory_space<any>>) target(%1 : memref<2x4x16x16xf32, #tpu.memory_space<any>>) target_semaphore(%3 : memref<!tpu.dma_semaphore, #tpu.memory_space<semaphore_mem>>)
    %c0_i32_8 = arith.constant 0 : i32
    %c0_i32_9 = arith.constant 0 : i32
    %c0_i32_10 = arith.constant 0 : i32
    %c0_i32_11 = arith.constant 0 : i32
    %c0_i32_12 = arith.constant 0 : i32
    %4 = tpu.memref_slice %arg0[%c0_i32_9, %c0_i32_10, %c0_i32_11, %c0_i32_12] : memref<2x4x16x16xf32, #tpu.memory_space<any>> -> memref<2x4x16x16xf32, #tpu.memory_space<any>>
    %c0_i32_13 = arith.constant 0 : i32
    %c0_i32_14 = arith.constant 0 : i32
    %c0_i32_15 = arith.constant 0 : i32
    %c0_i32_16 = arith.constant 0 : i32
    %5 = tpu.memref_slice %arg1[%c0_i32_13, %c0_i32_14, %c0_i32_15, %c0_i32_16] : memref<2x4x16x16xf32, #tpu.memory_space<any>> -> memref<2x4x16x16xf32, #tpu.memory_space<any>>
    %6 = tpu.memref_slice %arg2[%c0_i32_8] : memref<1x!tpu.dma_semaphore, #tpu.memory_space<semaphore_mem>> -> memref<1x!tpu.dma_semaphore, #tpu.memory_space<semaphore_mem>>
    %7 = tpu.memref_squeeze %6 : memref<1x!tpu.dma_semaphore, #tpu.memory_space<semaphore_mem>> -> memref<!tpu.dma_semaphore, #tpu.memory_space<semaphore_mem>>
    tpu.wait_dma2 semaphore(%7 : memref<!tpu.dma_semaphore, #tpu.memory_space<semaphore_mem>>) src(%4 : memref<2x4x16x16xf32, #tpu.memory_space<any>>) dst(%5 : memref<2x4x16x16xf32, #tpu.memory_space<any>>)
    return
  }
}

</mosaic_0001>

<llo_original>
// kernel: tpu_custom_call.1
$region0: #{tpu_custom_call.1}
  #allocation0 [shape = 'u32[]', space=smem, size = 0x4, offset = 0x4, fixed_abs, tag = 'smem constant byte address 0x4 - core index']
  #allocation1 [shape = 'u32[144,128]{1,0:T(1,128)}', space=vmem, size = 0x12000, scoped, tag = 'internal scratch']
  #allocation2 [shape = 's32[1]{0}', space=sflag, size = 0x4, scoped, tag = 'scratch operand']
  #allocation3 [shape = 's32[]', space=sflag, size = 0x4, offset = 0, fixed_abs, tag = 'sflag constant byte address 0x0 - dummy sync flag']
  #allocation4 [shape = 'u32[0]{0}', space=smem, size = 0, offset = 0, fixed_abs, tag = 'smem constant byte address 0x0 - null']
  %s0 = inlined_call_operand.hbm [shape: f32[2,4,16,16], index: 0, kind: input, shape index: {}]
  %s1 = inlined_call_operand.hbm [shape: f32[2,4,16,16], index: 1, kind: output, shape index: {}]
  %s2 = sld [smem:[#allocation0]]
  $region2: #{tpu_custom_call.1} parent=0
    _
  %s4 = ssub.s32 1, %s2
  %s5 = scalar_select 0, %s4, %s2
  %s7 = sshll.u32 1, 14
  %s8 = sxor.u32 4294967295, %s7
  %s11 = sshll.u32 3, 24
  %s12 = sxor.u32 4294967295, %s11
  %s13 = sand.u32 0, %s12
  %s15 = sor.u32 %s13, 0
  %18 = dma.general %s0, 2048, %s1, [#allocation2], [#allocation3], [#allocation4], %s15, 0
  %s19 = smul.u32 2, 4
  %s20 = smul.u32 %s19, 16
  %s21 = smul.u32 %s20, 1
  %s22 = sshll.u32 %s21, 4
  %23 = dma.done [#allocation2], %s22
  %24 = vsyncmov [#allocation2]
  %s25 = vpop.sfrf %24
  %p26 = scmp.eq.s32.totalorder %s25, 0
  %p27 = pneg %p26
  %29 = shalt.err (%p27)

</llo_original>
